<compile_context>
chip_gen: v7x
topology: tpu7x:2x2x1
jax: 0.10.0
libtpu: 0.0.40
codegen_flags: <defaults>
</compile_context>

<pallas_src>
import numpy as np
import jax
import jax.numpy as jnp
from jax.experimental import pallas as pl
from jax.experimental.pallas import tpu as pltpu

_LANE = 128
_TARGET_BLOCK_ELEMS = 512 * 1024   # 2 MiB f32 per block
_MIN_BLOCK_ELEMS = 64 * 1024       # don't shrink below 256 KiB just to tile exactly


def _curve_kernel(params_ref, x_ref, y_ref):
    """params (SMEM f32[4]): [a, b, k, k*x0] — grid-invariant scalars."""
    a = params_ref[0]
    b = params_ref[1]
    k = params_ref[2]
    kx0 = params_ref[3]
    x = x_ref[...]
    # y = a / (1 + exp(-k*(x - x0))) - b  ==  a * recip(1 + exp(k*x0 - k*x)) - b
    denom = 1.0 + jnp.exp(kx0 - k * x)
    y_ref[...] = a * pl.reciprocal(denom, approx=False) - b


def _run_slab(params, x2d, block_rows, n_blocks):
    rows, cols = x2d.shape
    return pl.pallas_call(
        _curve_kernel,
        out_shape=jax.ShapeDtypeStruct((rows, cols), jnp.float32),
        grid=(n_blocks,),
        in_specs=[
            pl.BlockSpec(memory_space=pltpu.MemorySpace.SMEM),
            pl.BlockSpec((block_rows, cols), lambda i: (i, 0)),
        ],
        out_specs=pl.BlockSpec((block_rows, cols), lambda i: (i, 0)),
        compiler_params=pltpu.CompilerParams(
            dimension_semantics=("parallel",)),
    )(params, x2d)


def _choose_cols(total):
    # Widest lane-dense last dim (multiple of 128) that divides total.
    for c in (2048, 1024, 512, 256, 128):
        if total % c == 0:
            return c
    return _LANE


def _choose_block_rows(rows, cols):
    max_rows = max(8, _TARGET_BLOCK_ELEMS // cols)
    if rows <= max_rows:
        return rows                       # one block == full array dims
    min_rows = max(8, _MIN_BLOCK_ELEMS // cols)
    d = (max_rows // 8) * 8
    while d >= min_rows:                  # prefer an exact-tiling divisor
        if rows % d == 0:
            return d
        d -= 8
    return (max_rows // 8) * 8            # non-divisor; remainder handled separately


def curve_mapping_forward(x, k, x0):
    """Applies the CurveMapping forward pass.

    Returns (y, [k, x0, a, b]) matching the PyTorch module; y has x's shape.
    """
    orig_shape = x.shape
    total = int(np.prod(orig_shape))

    kf = jnp.asarray(k, jnp.float32)
    x0f = jnp.asarray(x0, jnp.float32)
    e_kx0 = jnp.exp(kf * x0f)
    e_kx0_mk = jnp.exp(kf * x0f - kf)
    a = (1.0 + e_kx0) * (1.0 + e_kx0_mk) / (e_kx0 - e_kx0_mk)
    b = a / (1.0 + e_kx0)
    params = jnp.stack([a, b, kf, kf * x0f]).astype(jnp.float32)

    x_flat = jnp.reshape(x, (-1,)).astype(jnp.float32)

    cols = _choose_cols(total)
    rows = total // cols
    aligned = rows * cols

    pieces = []
    if rows > 0:
        block_rows = _choose_block_rows(rows, cols)
        n_blocks = rows // block_rows
        bulk_rows = n_blocks * block_rows
        x_bulk = jnp.reshape(x_flat[: bulk_rows * cols], (bulk_rows, cols))
        y_bulk = _run_slab(params, x_bulk, block_rows, n_blocks)
        pieces.append(jnp.reshape(y_bulk, (-1,)))
        rem_rows = rows - bulk_rows
        if rem_rows > 0:
            # Rare leftover slab: one call, block == full array dims.
            x_rem = jnp.reshape(x_flat[bulk_rows * cols: aligned], (rem_rows, cols))
            y_rem = _run_slab(params, x_rem, rem_rows, 1)
            pieces.append(jnp.reshape(y_rem, (-1,)))
    if aligned < total:
        # Sub-lane tail (< 128 elements): plain jnp elementwise.
        xt = x_flat[aligned:]
        pieces.append(a / (1.0 + jnp.exp(kf * x0f - kf * xt)) - b)

    if not pieces:
        y_flat = jnp.zeros((0,), jnp.float32)
    elif len(pieces) == 1:
        y_flat = pieces[0]
    else:
        y_flat = jnp.concatenate(pieces)
    y = jnp.reshape(y_flat, orig_shape)

    # Glue: para_list = [k, x0, a, b] as numpy scalars (matches PyTorch module).
    para_list = [np.asarray(kf), np.asarray(x0f), np.asarray(a), np.asarray(b)]
    return y, para_list


if __name__ == "__main__":
    # Deterministic parameter init (matches nn.Parameter defaults in __init__).
    k = jnp.float32(5.0)
    x0 = jnp.float32(0.5)

    def ref_fn(xx):
        e_kx0 = jnp.exp(k * x0)
        e_kx0_mk = jnp.exp(k * x0 - k)
        a = (1.0 + e_kx0) * (1.0 + e_kx0_mk) / (e_kx0 - e_kx0_mk)
        b = a / (1.0 + e_kx0)
        return a / (1.0 + jnp.exp(-k * (xx - x0))) - b

    key = jax.random.PRNGKey(0)
    shapes = [
        (2, 4, 16, 16),      # primary small NCHW input: single full-array block
        (1, 3, 17, 23),      # non-128-multiple total → kernel slab + tiny jnp tail
        (4, 16, 128, 128),   # multi-block grid (2 x 2 MiB lane-dense blocks)
    ]
    for shp in shapes:
        key, sub = jax.random.split(key)
        x = jax.random.uniform(sub, shp, dtype=jnp.float32)
        y, para_list = curve_mapping_forward(x, k, x0)
        y = jax.block_until_ready(y)
        np.testing.assert_allclose(np.asarray(y), np.asarray(ref_fn(x)),
                                   rtol=1e-5, atol=1e-5)
        assert len(para_list) == 4

    print("KERNEL_OK")
</pallas_src>

<mosaic_0001>
module attributes {stable_mosaic.version = 11 : i64} {
  func.func @_curve_kernel(%arg0: i32, %arg1: memref<4xf32, #tpu.memory_space<smem>>, %arg2: memref<1x2048xf32, #tpu.memory_space<vmem>>, %arg3: memref<1x2048xf32, #tpu.memory_space<vmem>>) attributes {dimension_semantics = [#tpu.dimension_semantics<parallel>], iteration_bounds = array<i64: 1>, scalar_prefetch = 0 : i64, scratch_operands = 0 : i64, tpu.core_type = #tpu.core_type<tc>, window_params = [{transform_indices = @transform_0, window_bounds = array<i64: 4>}, {transform_indices = @transform_1, window_bounds = array<i64: 1, 2048>}, {transform_indices = @transform_2, window_bounds = array<i64: 1, 2048>}]} {
    %c0 = arith.constant 0 : index
    %0 = memref.load %arg1[%c0] : memref<4xf32, #tpu.memory_space<smem>>
    %c1 = arith.constant 1 : index
    %1 = memref.load %arg1[%c1] : memref<4xf32, #tpu.memory_space<smem>>
    %c2 = arith.constant 2 : index
    %2 = memref.load %arg1[%c2] : memref<4xf32, #tpu.memory_space<smem>>
    %c3 = arith.constant 3 : index
    %3 = memref.load %arg1[%c3] : memref<4xf32, #tpu.memory_space<smem>>
    %c0_0 = arith.constant 0 : index
    %c0_1 = arith.constant 0 : index
    %4 = vector.load %arg2[%c0_0, %c0_1] : memref<1x2048xf32, #tpu.memory_space<vmem>>, vector<1x2048xf32>
    %5 = vector.broadcast %2 : f32 to vector<1x2048xf32>
    %6 = arith.mulf %5, %4 : vector<1x2048xf32>
    %7 = vector.broadcast %3 : f32 to vector<1x2048xf32>
    %8 = arith.subf %7, %6 : vector<1x2048xf32>
    %9 = math.exp %8 : vector<1x2048xf32>
    %cst = arith.constant 1.000000e+00 : f32
    %10 = vector.broadcast %cst : f32 to vector<1x2048xf32>
    %11 = arith.addf %10, %9 : vector<1x2048xf32>
    %12 = tpu.reciprocal %11 : vector<1x2048xf32> -> vector<1x2048xf32>
    %13 = vector.broadcast %0 : f32 to vector<1x2048xf32>
    %14 = arith.mulf %13, %12 : vector<1x2048xf32>
    %15 = vector.broadcast %1 : f32 to vector<1x2048xf32>
    %16 = arith.subf %14, %15 : vector<1x2048xf32>
    %c0_2 = arith.constant 0 : index
    %c0_3 = arith.constant 0 : index
    %17 = vector.load %arg3[%c0_2, %c0_3] : memref<1x2048xf32, #tpu.memory_space<vmem>>, vector<1x2048xf32>
    tpu.vector_store %arg3[%c0_2, %c0_3], %16 {strides = array<i32>} : memref<1x2048xf32, #tpu.memory_space<vmem>>, vector<1x2048xf32>,
    return
  }
  func.func @transform_0(%arg0: i32) -> i32 {
    %c0_i32 = arith.constant 0 : i32
    %c0_i32_0 = arith.constant 0 : i32
    return %c0_i32 : i32
  }
  func.func @transform_1(%arg0: i32) -> (i32, i32) {
    %c0_i32 = arith.constant 0 : i32
    %c0_i32_0 = arith.constant 0 : i32
    return %arg0, %c0_i32 : i32, i32
  }
  func.func @transform_2(%arg0: i32) -> (i32, i32) {
    %c0_i32 = arith.constant 0 : i32
    %c0_i32_0 = arith.constant 0 : i32
    return %arg0, %c0_i32 : i32, i32
  }
}

</mosaic_0001>

<llo_original>
// kernel: tpu_custom_call.1
$region0: #{tpu_custom_call.1}
  #allocation0 [shape = 'u32[]', space=smem, size = 0x4, offset = 0x4, fixed_abs, tag = 'smem constant byte address 0x4 - core index']
  #allocation1 [shape = 'u32[144,128]{1,0:T(1,128)}', space=vmem, size = 0x12000, scoped, tag = 'internal scratch']
  %s0 = inlined_call_operand.hbm [shape: f32[4], index: 0, kind: input, shape index: {}]
  %s1 = inlined_call_operand.hbm [shape: f32[1,2048], index: 1, kind: input, shape index: {}]
  %s2 = inlined_call_operand.hbm [shape: f32[1,2048], index: 2, kind: output, shape index: {}]
  %s3 = sld [smem:[#allocation0]]
  $region26: #{tpu_custom_call.1} parent=0
    _
  %s5 = ssub.s32 1, %s3
  %s6 = scalar_select 0, %s5, %s3
  $region1: #{tpu_custom_call.1} parent=0
    #allocation2 [shape = 'u8[512]{0}', space=smem, size = 0x200, scoped, tag = 'input window, operand 0, single buffered']
    #allocation3 [shape = 's32[1]{0}', space=sflag, size = 0x4, scoped, tag = 'scoped memory for tpu_custom_call.1']
    #allocation4 [shape = 's32[1]{0}', space=sflag, size = 0x4, scoped, tag = 'scoped memory for tpu_custom_call.1']
    #allocation5 [shape = 's32[1]{0}', space=sflag, size = 0x4, scoped, tag = 'scoped memory for tpu_custom_call.1']
    #allocation6 [shape = 'u8[8192]{0}', space=vmem, size = 0x2000, scoped, tag = 'input window, operand 1, single buffered']
    #allocation7 [shape = 'u8[8192]{0}', space=vmem, size = 0x2000, scoped, tag = 'output window, operand 0, single buffered']
    %7 = vsyncpa [#allocation5], 0
    %8 = vsyncpa [#allocation3], 0
    %9 = vsyncpa [#allocation4], 0
    // Predicated region
    $region2: #{tpu_custom_call.1} parent=1 // pred_check
      _
    $region3: #{tpu_custom_call.1} parent=1 // pred_check_branch
      %11 = sbr.rel (0) target = $region5
    $region4: #{tpu_custom_call.1} parent=1 // pred_region
      %s13 = ssub.s32 16, 16
      %14 = vsyncadd [#allocation5], %s13
      %17 = dma.hbm_to_smem %s0, 16, [#allocation2], [#allocation5]
    $region5: #{tpu_custom_call.1} parent=1 // pred_fallthru
      _
    // Predicated region
    $region6: #{tpu_custom_call.1} parent=1 // pred_check
      _
    $region7: #{tpu_custom_call.1} parent=1 // pred_check_branch
      %19 = sbr.rel (0) target = $region9
    $region8: #{tpu_custom_call.1} parent=1 // pred_region
      %s21 = ssub.s32 256, 256
      %22 = vsyncadd [#allocation3], %s21
      %s24 = sshll.u32 [#allocation6], 4
      %s25 = int_to_ptr.vmem [resolvable:$true] %s24
      %27 = dma.hbm_to_vmem [thread:$0]  %s1, 256, %s25, [#allocation3]
    $region9: #{tpu_custom_call.1} parent=1 // pred_fallthru
      _
    // Predicated region
    $region10: #{tpu_custom_call.1} parent=1 // pred_check
      _
    $region11: #{tpu_custom_call.1} parent=1 // pred_check_branch
      %29 = sbr.rel (0) target = $region13
    $region12: #{tpu_custom_call.1} parent=1 // pred_region
      %30 = dma.done [#allocation5], 16
    $region13: #{tpu_custom_call.1} parent=1 // pred_fallthru
      _
    // Predicated region
    $region14: #{tpu_custom_call.1} parent=1 // pred_check
      _
    $region15: #{tpu_custom_call.1} parent=1 // pred_check_branch
      %32 = sbr.rel (0) target = $region17
    $region16: #{tpu_custom_call.1} parent=1 // pred_region
      %33 = dma.done [#allocation3], 256
    $region17: #{tpu_custom_call.1} parent=1 // pred_fallthru
      _
    %34 = sfence
    %s35 = sld [smem:[#allocation2]]
    %s36 = sld [smem:[#allocation2 + $0x1]]
    %s37 = sld [smem:[#allocation2 + $0x2]]
    %s38 = sld [smem:[#allocation2 + $0x3]]
    %v39 = vld [vmem:[#allocation6] sm:$0xff]
    %v40 = vld [vmem:[#allocation6 + $0x8] sm:$0xff]
    %v41 = vstv %s37
    %v42 = vmul.f32 %v41, %v39
    %v43 = vmul.f32 %v41, %v40
    %v44 = vstv %s38
    %v45 = vsub.f32 %v44, %v42
    %v46 = vsub.f32 %v44, %v43
    %v47 = vmul.f32 %v45, 1.442695
    %v48 = vpow.pop %v47
    %v49 = vmul.f32 %v46, 1.442695
    %v50 = vpow.pop %v49
    %v51 = vadd.f32 %v48, 1.0
    %v52 = vadd.f32 %v50, 1.0
    %v53 = vrcp.pop %v51
    %v54 = vrcp.pop %v52
    %v55 = vstv %s35
    %v56 = vmul.f32 %v55, %v53
    %v57 = vmul.f32 %v55, %v54
    %v58 = vstv %s36
    %v59 = vsub.f32 %v56, %v58
    %v60 = vsub.f32 %v57, %v58
    %61 = vst [vmem:[#allocation7] sm:$0xff] %v59
    %62 = vst [vmem:[#allocation7 + $0x8] sm:$0xff] %v60
    // Predicated region
    $region18: #{tpu_custom_call.1} parent=1 // pred_check
      _
    $region19: #{tpu_custom_call.1} parent=1 // pred_check_branch
      %64 = sbr.rel (0) target = $region21
    $region20: #{tpu_custom_call.1} parent=1 // pred_region
      %s66 = ssub.s32 256, 256
      %67 = vsyncadd [#allocation4], %s66
      %s69 = sshll.u32 [#allocation7], 4
      %s70 = int_to_ptr.vmem [resolvable:$true] %s69
      %72 = dma.vmem_to_hbm [thread:$0]  %s70, 256, %s2, [#allocation4]
    $region21: #{tpu_custom_call.1} parent=1 // pred_fallthru
      _
    // Predicated region
    $region22: #{tpu_custom_call.1} parent=1 // pred_check
      _
    $region23: #{tpu_custom_call.1} parent=1 // pred_check_branch
      %74 = sbr.rel (0) target = $region25
    $region24: #{tpu_custom_call.1} parent=1 // pred_region
      %75 = dma.done [#allocation4], 256
    $region25: #{tpu_custom_call.1} parent=1 // pred_fallthru
      _
    %76 = vsyncpa [#allocation3], 1
    %77 = vsyncpa [#allocation4], 1
    %78 = vsyncpa [#allocation5], 1

</llo_original>
